<compile_context>
chip_gen: v6e
topology: v6e:2x2x1
jax: 0.10.0
libtpu: 0.0.40
codegen_flags: <defaults>
</compile_context>

<pallas_src>
import functools

import numpy as np
import jax
import jax.numpy as jnp
from jax.experimental import pallas as pl
from jax.experimental.pallas import tpu as pltpu


def _buffer_attend_kernel(x_ref, buf_ref, mask_ref,
                          wq_ref, bq_ref, wk_ref, bk_ref, wv_ref, bv_ref,
                          o_ref, *, num_heads, key_channel, val_channel,
                          exp_in_bf16):
    """Processes a (block_b, q/k, ...) slab of batch elements per grid step."""
    bt, q, d_in = x_ref.shape
    _, k, _ = buf_ref.shape

    # Merge (block_b, rows) so the projection matmuls present a real M dim to the MXU.
    # Activations are bf16 -> native MXU path; accumulation stays f32.
    x2d = x_ref[...].reshape(bt * q, d_in)
    buf2d = buf_ref[...].reshape(bt * k, d_in)

    # Mask handling hoisted out of the head loop: one additive bias + one validity row.
    # Mask arrives as int8; cheap VPU cast to {0., 1.}.
    m = mask_ref[...].astype(jnp.float32)                 # (bt, q, k) in {0, 1}
    mask_bias = (m - 1.0) * jnp.float32(2.0 ** 12)        # 0 where valid / -4096 masked
    any_valid = jnp.max(m, axis=-1, keepdims=True)        # (bt, q, 1) in {0, 1}

    reads = []
    for h in range(num_heads):                            # static, small head count
        # Per-head weight blocks: slicing the leading (head) axis is free.  Dk/Dv are
        # not 128-lane aligned, so head-fused projections would need lane shuffles —
        # keep per-head N=Dk/Dv matmuls.  1/sqrt(Dk) is pre-folded into wq/bq.
        q_h = (jnp.dot(x2d, wq_ref[h], preferred_element_type=jnp.float32)
               + bq_ref[h]).reshape(bt, q, key_channel)
        k_h = (jnp.dot(buf2d, wk_ref[h], preferred_element_type=jnp.float32)
               + bk_ref[h]).reshape(bt, k, key_channel)
        v_h = (jnp.dot(buf2d, wv_ref[h], preferred_element_type=jnp.float32)
               + bv_ref[h]).reshape(bt, k, val_channel).astype(jnp.bfloat16)

        # Batched contraction over the last axis — no explicit transpose (no XLU);
        # bf16 operands keep the MXU on its fast path, f32 accumulation.
        logits = jnp.einsum('bqd,bkd->bqk',
                            q_h.astype(jnp.bfloat16), k_h.astype(jnp.bfloat16),
                            preferred_element_type=jnp.float32) + mask_bias
        mx = jnp.max(logits, axis=-1, keepdims=True)
        centered = logits - mx
        if exp_in_bf16:
            # v6e/v7x: bf16 exp ~doubles EUP throughput; denominator kept in f32.
            e = jnp.exp(centered.astype(jnp.bfloat16))
            denom = jnp.sum(e, axis=-1, keepdims=True, dtype=jnp.float32)
            inv = pl.reciprocal(denom, approx=True) * any_valid
            probs = e * inv.astype(jnp.bfloat16)          # bf16 probs feed the MXU
        else:
            e = jnp.exp(centered)
            denom = jnp.sum(e, axis=-1, keepdims=True)
            inv = pl.reciprocal(denom, approx=True) * any_valid
            probs = (e * inv).astype(jnp.bfloat16)
        # Fully-masked query rows are zeroed via any_valid folded into the (bt, q, 1)
        # factor, so only one broadcast multiply hits the (bt, q, k) tile.
        reads.append(jnp.einsum('bqk,bkd->bqd', probs, v_h,
                                preferred_element_type=jnp.float32))

    # Single concatenated store of the full (bt, q, H*Dv) slab.  For large H, switch
    # to a persistent VMEM scratch accumulator to bound live ranges (H here is tiny).
    o_ref[...] = jnp.concatenate(reads, axis=-1).astype(o_ref.dtype)


def _device_kind():
    try:
        return jax.devices()[0].device_kind.lower()
    except Exception:
        return ""


def _pad_axis(a, axis, new_size):
    pad = [(0, 0)] * a.ndim
    pad[axis] = (0, new_size - a.shape[axis])
    return jnp.pad(a, pad)


def buffer_attend_1d(x, buffer, mask, params, *, num_heads, key_channel,
                     val_channel, block_b=None):
    B, q, d_in = x.shape
    _, k, _ = buffer.shape
    hv = num_heads * val_channel
    out_dtype = x.dtype
    out_bytes = jnp.dtype(out_dtype).itemsize

    kind = _device_kind()
    is_v7_like = ("v7" in kind) or (kind == "")          # conservative when unknown
    exp_in_bf16 = ("v6" in kind) or ("v7" in kind)       # bf16 EUP on v6e/v7x only

    # Keep q/k multiples of 8 so the in-kernel merges/splits are layout-free.  Padded
    # key columns are masked out; padded query rows are sliced off after the call.
    q_p = -(-q // 8) * 8
    k_p = -(-k // 8) * 8
    if q_p != q:
        x = _pad_axis(x, 1, q_p)
    if k_p != k:
        buffer = _pad_axis(buffer, 1, k_p)
    if (q_p, k_p) != (q, k):
        mask = _pad_axis(_pad_axis(mask, 1, q_p), 2, k_p)

    scale = jnp.float32(1.0 / np.sqrt(key_channel))

    def per_head(w, b, d_out, s=None):
        w = w.astype(jnp.float32).reshape(d_in, num_heads, d_out).transpose(1, 0, 2)
        b = b.astype(jnp.float32).reshape(num_heads, 1, d_out)
        if s is not None:
            w = w * s
            b = b * s
        return w.astype(jnp.bfloat16), b                  # bf16 weights, f32 biases

    wq, bq = per_head(params["wq"], params["bq"], key_channel, scale)  # scale folded in
    wk, bk = per_head(params["wk"], params["bk"], key_channel)
    wv, bv = per_head(params["wv"], params["bv"], val_channel)

    # bf16 activations (native MXU, halves x/buffer HBM bytes); int8 mask stream.
    x_b = x.astype(jnp.bfloat16)
    buf_b = buffer.astype(jnp.bfloat16)
    mask_i8 = mask.astype(jnp.int8)

    def vmem_est(bb):
        # Double-buffered pipeline copies of every blocked operand + in-kernel f32
        # temporaries.  The (bb, q, k) softmax tiles and the (bb, k, d_in) buffer tile
        # scale with k and dominate when k >> q.
        io = 2 * (bb * q_p * d_in * 2 + bb * k_p * d_in * 2
                  + bb * q_p * k_p * 1 + bb * q_p * hv * out_bytes)
        w_bytes = 2 * (num_heads * d_in * (2 * key_channel + val_channel) * 2
                       + num_heads * (2 * key_channel + val_channel) * 4)
        tmp = 4 * bb * q_p * k_p * 4                              # mask bias + softmax temps
        tmp += bb * (q_p * key_channel + k_p * (key_channel + val_channel)) * 4
        tmp += num_heads * bb * q_p * val_channel * 4             # per-head reads until concat
        return io + w_bytes + tmp

    if block_b is None:
        # Working-set budget: stay well inside v7x's 64 MiB; v5e/v6e (128 MiB physical)
        # get a larger budget so tiles reach the ~512+ projection-row regime.
        budget = (40 << 20) if is_v7_like else (88 << 20)
        rows_target = 512
        max_bb = B
        if is_v7_like and B >= 2:
            max_bb = max(1, B // 2)   # >=2 grid steps so both v7x TensorCores get work
        block_b = 1
        for bb in range(1, max_bb + 1):
            if B % bb:
                continue
            if vmem_est(bb) > budget:
                break
            block_b = bb
            if bb * max(q_p, k_p) >= rows_target:
                break

    vmem_cap = (56 << 20) if is_v7_like else (100 << 20)
    vmem_limit = int(min(vmem_cap,
                         max(32 << 20, vmem_est(block_b) * 3 // 2 + (4 << 20))))

    kernel = functools.partial(_buffer_attend_kernel, num_heads=num_heads,
                               key_channel=key_channel, val_channel=val_channel,
                               exp_in_bf16=exp_in_bf16)

    grid_spec = pltpu.PrefetchScalarGridSpec(
        num_scalar_prefetch=0,
        grid=(B // block_b,),
        in_specs=[
            pl.BlockSpec((block_b, q_p, d_in), lambda b: (b, 0, 0)),               # x
            pl.BlockSpec((block_b, k_p, d_in), lambda b: (b, 0, 0)),               # buffer
            pl.BlockSpec((block_b, q_p, k_p), lambda b: (b, 0, 0)),                # mask
            pl.BlockSpec((num_heads, d_in, key_channel), lambda b: (0, 0, 0)),     # Wq
            pl.BlockSpec((num_heads, 1, key_channel), lambda b: (0, 0, 0)),        # bq
            pl.BlockSpec((num_heads, d_in, key_channel), lambda b: (0, 0, 0)),     # Wk
            pl.BlockSpec((num_heads, 1, key_channel), lambda b: (0, 0, 0)),        # bk
            pl.BlockSpec((num_heads, d_in, val_channel), lambda b: (0, 0, 0)),     # Wv
            pl.BlockSpec((num_heads, 1, val_channel), lambda b: (0, 0, 0)),        # bv
        ],
        out_specs=pl.BlockSpec((block_b, q_p, hv), lambda b: (b, 0, 0)),
    )

    flops = (2 * B * q_p * d_in * num_heads * key_channel
             + 2 * B * k_p * d_in * num_heads * (key_channel + val_channel)
             + 2 * B * num_heads * q_p * k_p * (key_channel + val_channel))
    bytes_accessed = (x_b.size * 2 + buf_b.size * 2 + mask_i8.size
                      + (wq.size + wk.size + wv.size) * 2
                      + (bq.size + bk.size + bv.size) * 4
                      + B * q_p * hv * out_bytes)

    out = pl.pallas_call(
        kernel,
        out_shape=jax.ShapeDtypeStruct((B, q_p, hv), out_dtype),
        grid_spec=grid_spec,
        compiler_params=pltpu.CompilerParams(
            dimension_semantics=("parallel",),
            vmem_limit_bytes=vmem_limit),
        cost_estimate=pl.CostEstimate(flops=flops,
                                      transcendentals=B * num_heads * q_p * k_p,
                                      bytes_accessed=bytes_accessed),
    )(x_b, buf_b, mask_i8, wq, bq, wk, bk, wv, bv)

    if q_p != q:
        out = out[:, :q, :]
    return out


def _reference(x, buffer, mask, params, num_heads, key_channel, val_channel):
    """Pure-JAX f32 reference that mirrors the PyTorch forward exactly."""
    query = (x.astype(jnp.float32) @ params["wq"] + params["bq"][0])
    keys = (buffer.astype(jnp.float32) @ params["wk"] + params["bk"][0])
    vals = (buffer.astype(jnp.float32) @ params["wv"] + params["bv"][0])
    B, q, _ = x.shape
    k = buffer.shape[1]
    query = query.reshape(B, q, num_heads, key_channel)
    keys = keys.reshape(B, k, num_heads, key_channel)
    vals = vals.reshape(B, k, num_heads, val_channel)
    logits = jnp.einsum('bqhd,bkhd->bqkh', query, keys) / np.sqrt(key_channel)
    logits = jnp.where(mask[..., None], logits, -(2.0 ** 12))
    probs = jax.nn.softmax(logits, axis=-2)
    probs = jnp.where(jnp.any(mask, axis=-1, keepdims=True)[..., None], probs, 0.0)
    read = jnp.einsum('bqkh,bkhd->bqhd', probs, vals).astype(x.dtype)
    return read.reshape(B, q, num_heads * val_channel)


if __name__ == "__main__":
    B, q, k, d_in = 2, 8, 16, 32
    num_heads, key_channel, val_channel = 2, 16, 16
    hk, hv = num_heads * key_channel, num_heads * val_channel

    key = jax.random.PRNGKey(0)
    ks = jax.random.split(key, 10)
    x = jax.random.normal(ks[0], (B, q, d_in), dtype=jnp.float32)
    buffer = jax.random.normal(ks[1], (B, k, d_in), dtype=jnp.float32)
    mask = jax.random.bernoulli(ks[2], 0.7, (B, q, k))
    # Force one query row with no valid keys to exercise the zeroing path.
    mask = mask.at[0, 0, :].set(False)

    # Deterministic "Linear" parameters (stored already transposed: (d_in, out)).
    s = 1.0 / np.sqrt(d_in)
    params = {
        "wq": jax.random.uniform(ks[3], (d_in, hk), jnp.float32, -s, s),
        "bq": jax.random.uniform(ks[4], (1, hk), jnp.float32, -s, s),
        "wk": jax.random.uniform(ks[5], (d_in, hk), jnp.float32, -s, s),
        "bk": jax.random.uniform(ks[6], (1, hk), jnp.float32, -s, s),
        "wv": jax.random.uniform(ks[7], (d_in, hv), jnp.float32, -s, s),
        "bv": jax.random.uniform(ks[8], (1, hv), jnp.float32, -s, s),
    }

    out = buffer_attend_1d(x, buffer, mask, params, num_heads=num_heads,
                           key_channel=key_channel, val_channel=val_channel)
    out = jax.block_until_ready(out)

    ref = _reference(x, buffer, mask, params, num_heads, key_channel, val_channel)
    assert out.shape == (B, q, hv), out.shape
    # Tolerance reflects bf16 MXU operands / bf16 softmax numerator / approx
    # reciprocal; accumulation stays f32 so errors are at the bf16-rounding level.
    np.testing.assert_allclose(np.asarray(out), np.asarray(ref), rtol=3e-2, atol=3e-2)
    print("KERNEL_OK")
</pallas_src>

<mosaic_0001>
module attributes {stable_mosaic.version = 11 : i64} {
  func.func @_buffer_attend_kernel(%arg0: i32, %arg1: memref<2x8x32xbf16, #tpu.memory_space<vmem>>, %arg2: memref<2x16x32xbf16, #tpu.memory_space<vmem>>, %arg3: memref<2x8x16xi8, #tpu.memory_space<vmem>>, %arg4: memref<2x32x16xbf16, #tpu.memory_space<vmem>>, %arg5: memref<2x1x16xf32, #tpu.memory_space<vmem>>, %arg6: memref<2x32x16xbf16, #tpu.memory_space<vmem>>, %arg7: memref<2x1x16xf32, #tpu.memory_space<vmem>>, %arg8: memref<2x32x16xbf16, #tpu.memory_space<vmem>>, %arg9: memref<2x1x16xf32, #tpu.memory_space<vmem>>, %arg10: memref<2x8x32xf32, #tpu.memory_space<vmem>>) attributes {dimension_semantics = [#tpu.dimension_semantics<parallel>], iteration_bounds = array<i64: 1>, scalar_prefetch = 0 : i64, scratch_operands = 0 : i64, tpu.core_type = #tpu.core_type<tc>, window_params = [{transform_indices = @transform_0, window_bounds = array<i64: 2, 8, 32>}, {transform_indices = @transform_1, window_bounds = array<i64: 2, 16, 32>}, {transform_indices = @transform_2, window_bounds = array<i64: 2, 8, 16>}, {pipeline_mode = #tpu.pipeline_mode<synchronous>, transform_indices = @transform_3, window_bounds = array<i64: 2, 32, 16>}, {pipeline_mode = #tpu.pipeline_mode<synchronous>, transform_indices = @transform_4, window_bounds = array<i64: 2, 1, 16>}, {pipeline_mode = #tpu.pipeline_mode<synchronous>, transform_indices = @transform_5, window_bounds = array<i64: 2, 32, 16>}, {pipeline_mode = #tpu.pipeline_mode<synchronous>, transform_indices = @transform_6, window_bounds = array<i64: 2, 1, 16>}, {pipeline_mode = #tpu.pipeline_mode<synchronous>, transform_indices = @transform_7, window_bounds = array<i64: 2, 32, 16>}, {pipeline_mode = #tpu.pipeline_mode<synchronous>, transform_indices = @transform_8, window_bounds = array<i64: 2, 1, 16>}, {transform_indices = @transform_9, window_bounds = array<i64: 2, 8, 32>}]} {
    %c0 = arith.constant 0 : index
    %c0_0 = arith.constant 0 : index
    %c0_1 = arith.constant 0 : index
    %0 = vector.load %arg1[%c0, %c0_0, %c0_1] : memref<2x8x32xbf16, #tpu.memory_space<vmem>>, vector<2x8x32xbf16>
    %1 = vector.shape_cast %0 : vector<2x8x32xbf16> to vector<16x32xbf16>
    %c0_2 = arith.constant 0 : index
    %c0_3 = arith.constant 0 : index
    %c0_4 = arith.constant 0 : index
    %2 = vector.load %arg2[%c0_2, %c0_3, %c0_4] : memref<2x16x32xbf16, #tpu.memory_space<vmem>>, vector<2x16x32xbf16>
    %3 = vector.shape_cast %2 : vector<2x16x32xbf16> to vector<32x32xbf16>
    %c0_5 = arith.constant 0 : index
    %c0_6 = arith.constant 0 : index
    %c0_7 = arith.constant 0 : index
    %4 = vector.load %arg3[%c0_5, %c0_6, %c0_7] : memref<2x8x16xi8, #tpu.memory_space<vmem>>, vector<2x8x16xi8>
    %5 = arith.sitofp %4 : vector<2x8x16xi8> to vector<2x8x16xf32>
    %cst = arith.constant 1.000000e+00 : f32
    %6 = vector.broadcast %cst : f32 to vector<2x8x16xf32>
    %7 = arith.subf %5, %6 : vector<2x8x16xf32>
    %cst_8 = arith.constant 4.096000e+03 : f32
    %8 = vector.broadcast %cst_8 : f32 to vector<2x8x16xf32>
    %9 = arith.mulf %7, %8 : vector<2x8x16xf32>
    %cst_9 = arith.constant dense<0xFF800000> : vector<2x8xf32>
    %10 = vector.multi_reduction <maximumf>, %5, %cst_9 [2] : vector<2x8x16xf32> to vector<2x8xf32>
    %11 = vector.shape_cast %10 : vector<2x8xf32> to vector<2x8x1xf32>
    %c0_10 = arith.constant 0 : index
    %c0_11 = arith.constant 0 : index
    %c0_12 = arith.constant 0 : index
    %12 = vector.load %arg4[%c0_10, %c0_11, %c0_12] : memref<2x32x16xbf16, #tpu.memory_space<vmem>>, vector<1x32x16xbf16>
    %13 = vector.shape_cast %12 : vector<1x32x16xbf16> to vector<32x16xbf16>
    %cst_13 = arith.constant dense<0.000000e+00> : vector<16x16xf32>
    %14 = tpu.matmul %1, %13, %cst_13 {dimension_numbers = #tpu.dot_dimension_numbers<[1], [0], [0], [1], [0, 0, 1, 1], [], []>} : vector<16x32xbf16>, vector<32x16xbf16>, vector<16x16xf32> -> vector<16x16xf32>
    %c0_14 = arith.constant 0 : index
    %c0_15 = arith.constant 0 : index
    %c0_16 = arith.constant 0 : index
    %15 = vector.load %arg5[%c0_14, %c0_15, %c0_16] : memref<2x1x16xf32, #tpu.memory_space<vmem>>, vector<1x1x16xf32>
    %16 = vector.shape_cast %15 : vector<1x1x16xf32> to vector<1x16xf32>
    %17 = vector.broadcast %16 : vector<1x16xf32> to vector<16x16xf32>
    %18 = arith.addf %14, %17 : vector<16x16xf32>
    %19 = vector.shape_cast %18 : vector<16x16xf32> to vector<2x8x16xf32>
    %c0_17 = arith.constant 0 : index
    %c0_18 = arith.constant 0 : index
    %c0_19 = arith.constant 0 : index
    %20 = vector.load %arg6[%c0_17, %c0_18, %c0_19] : memref<2x32x16xbf16, #tpu.memory_space<vmem>>, vector<1x32x16xbf16>
    %21 = vector.shape_cast %20 : vector<1x32x16xbf16> to vector<32x16xbf16>
    %cst_20 = arith.constant dense<0.000000e+00> : vector<32x16xf32>
    %22 = tpu.matmul %3, %21, %cst_20 {dimension_numbers = #tpu.dot_dimension_numbers<[1], [0], [0], [1], [0, 0, 1, 1], [], []>} : vector<32x32xbf16>, vector<32x16xbf16>, vector<32x16xf32> -> vector<32x16xf32>
    %c0_21 = arith.constant 0 : index
    %c0_22 = arith.constant 0 : index
    %c0_23 = arith.constant 0 : index
    %23 = vector.load %arg7[%c0_21, %c0_22, %c0_23] : memref<2x1x16xf32, #tpu.memory_space<vmem>>, vector<1x1x16xf32>
    %24 = vector.shape_cast %23 : vector<1x1x16xf32> to vector<1x16xf32>
    %25 = vector.broadcast %24 : vector<1x16xf32> to vector<32x16xf32>
    %26 = arith.addf %22, %25 : vector<32x16xf32>
    %27 = vector.shape_cast %26 : vector<32x16xf32> to vector<2x16x16xf32>
    %c0_24 = arith.constant 0 : index
    %c0_25 = arith.constant 0 : index
    %c0_26 = arith.constant 0 : index
    %28 = vector.load %arg8[%c0_24, %c0_25, %c0_26] : memref<2x32x16xbf16, #tpu.memory_space<vmem>>, vector<1x32x16xbf16>
    %29 = vector.shape_cast %28 : vector<1x32x16xbf16> to vector<32x16xbf16>
    %cst_27 = arith.constant dense<0.000000e+00> : vector<32x16xf32>
    %30 = tpu.matmul %3, %29, %cst_27 {dimension_numbers = #tpu.dot_dimension_numbers<[1], [0], [0], [1], [0, 0, 1, 1], [], []>} : vector<32x32xbf16>, vector<32x16xbf16>, vector<32x16xf32> -> vector<32x16xf32>
    %c0_28 = arith.constant 0 : index
    %c0_29 = arith.constant 0 : index
    %c0_30 = arith.constant 0 : index
    %31 = vector.load %arg9[%c0_28, %c0_29, %c0_30] : memref<2x1x16xf32, #tpu.memory_space<vmem>>, vector<1x1x16xf32>
    %32 = vector.shape_cast %31 : vector<1x1x16xf32> to vector<1x16xf32>
    %33 = vector.broadcast %32 : vector<1x16xf32> to vector<32x16xf32>
    %34 = arith.addf %30, %33 : vector<32x16xf32>
    %35 = vector.shape_cast %34 : vector<32x16xf32> to vector<2x16x16xf32>
    %36 = arith.truncf %35 : vector<2x16x16xf32> to vector<2x16x16xbf16>
    %37 = arith.truncf %19 : vector<2x8x16xf32> to vector<2x8x16xbf16>
    %38 = arith.truncf %27 : vector<2x16x16xf32> to vector<2x16x16xbf16>
    "tpu.trace_start"() <{level = 10 : i32, message = "bqd,bkd->bqk"}> : () -> ()
    %cst_31 = arith.constant dense<0.000000e+00> : vector<2x8x16xf32>
    %39 = tpu.matmul %37, %38, %cst_31 {dimension_numbers = #tpu.dot_dimension_numbers<[2], [2], [1], [1], [0, 0, 0, 1, 1, 1], [0], [0]>} : vector<2x8x16xbf16>, vector<2x16x16xbf16>, vector<2x8x16xf32> -> vector<2x8x16xf32>
    "tpu.trace_stop"() : () -> ()
    %40 = arith.addf %39, %9 : vector<2x8x16xf32>
    %cst_32 = arith.constant dense<0xFF800000> : vector<2x8xf32>
    %41 = vector.multi_reduction <maximumf>, %40, %cst_32 [2] : vector<2x8x16xf32> to vector<2x8xf32>
    %42 = vector.shape_cast %41 : vector<2x8xf32> to vector<2x8x1xf32>
    %43 = vector.broadcast %42 : vector<2x8x1xf32> to vector<2x8x16xf32>
    %44 = arith.subf %40, %43 : vector<2x8x16xf32>
    %45 = math.exp %44 : vector<2x8x16xf32>
    %cst_33 = arith.constant dense<0.000000e+00> : vector<2x8xf32>
    %46 = vector.multi_reduction <add>, %45, %cst_33 [2] : vector<2x8x16xf32> to vector<2x8xf32>
    %47 = vector.shape_cast %46 : vector<2x8xf32> to vector<2x8x1xf32>
    %48 = tpu.reciprocal %47 {approx = true} : vector<2x8x1xf32> -> vector<2x8x1xf32>
    %49 = arith.mulf %48, %11 : vector<2x8x1xf32>
    %50 = vector.broadcast %49 : vector<2x8x1xf32> to vector<2x8x16xf32>
    %51 = arith.mulf %45, %50 : vector<2x8x16xf32>
    %52 = arith.truncf %51 : vector<2x8x16xf32> to vector<2x8x16xbf16>
    "tpu.trace_start"() <{level = 10 : i32, message = "bqk,bkd->bqd"}> : () -> ()
    %cst_34 = arith.constant dense<0.000000e+00> : vector<2x8x16xf32>
    %53 = tpu.matmul %52, %36, %cst_34 {dimension_numbers = #tpu.dot_dimension_numbers<[2], [1], [1], [2], [0, 0, 0, 1, 1, 2], [0], [0]>} : vector<2x8x16xbf16>, vector<2x16x16xbf16>, vector<2x8x16xf32> -> vector<2x8x16xf32>
    "tpu.trace_stop"() : () -> ()
    %c1 = arith.constant 1 : index
    %c0_35 = arith.constant 0 : index
    %c0_36 = arith.constant 0 : index
    %54 = vector.load %arg4[%c1, %c0_35, %c0_36] : memref<2x32x16xbf16, #tpu.memory_space<vmem>>, vector<1x32x16xbf16>
    %55 = vector.shape_cast %54 : vector<1x32x16xbf16> to vector<32x16xbf16>
    %cst_37 = arith.constant dense<0.000000e+00> : vector<16x16xf32>
    %56 = tpu.matmul %1, %55, %cst_37 {dimension_numbers = #tpu.dot_dimension_numbers<[1], [0], [0], [1], [0, 0, 1, 1], [], []>} : vector<16x32xbf16>, vector<32x16xbf16>, vector<16x16xf32> -> vector<16x16xf32>
    %c1_38 = arith.constant 1 : index
    %c0_39 = arith.constant 0 : index
    %c0_40 = arith.constant 0 : index
    %57 = vector.load %arg5[%c1_38, %c0_39, %c0_40] : memref<2x1x16xf32, #tpu.memory_space<vmem>>, vector<1x1x16xf32>
    %58 = vector.shape_cast %57 : vector<1x1x16xf32> to vector<1x16xf32>
    %59 = vector.broadcast %58 : vector<1x16xf32> to vector<16x16xf32>
    %60 = arith.addf %56, %59 : vector<16x16xf32>
    %61 = vector.shape_cast %60 : vector<16x16xf32> to vector<2x8x16xf32>
    %c1_41 = arith.constant 1 : index
    %c0_42 = arith.constant 0 : index
    %c0_43 = arith.constant 0 : index
    %62 = vector.load %arg6[%c1_41, %c0_42, %c0_43] : memref<2x32x16xbf16, #tpu.memory_space<vmem>>, vector<1x32x16xbf16>
    %63 = vector.shape_cast %62 : vector<1x32x16xbf16> to vector<32x16xbf16>
    %cst_44 = arith.constant dense<0.000000e+00> : vector<32x16xf32>
    %64 = tpu.matmul %3, %63, %cst_44 {dimension_numbers = #tpu.dot_dimension_numbers<[1], [0], [0], [1], [0, 0, 1, 1], [], []>} : vector<32x32xbf16>, vector<32x16xbf16>, vector<32x16xf32> -> vector<32x16xf32>
    %c1_45 = arith.constant 1 : index
    %c0_46 = arith.constant 0 : index
    %c0_47 = arith.constant 0 : index
    %65 = vector.load %arg7[%c1_45, %c0_46, %c0_47] : memref<2x1x16xf32, #tpu.memory_space<vmem>>, vector<1x1x16xf32>
    %66 = vector.shape_cast %65 : vector<1x1x16xf32> to vector<1x16xf32>
    %67 = vector.broadcast %66 : vector<1x16xf32> to vector<32x16xf32>
    %68 = arith.addf %64, %67 : vector<32x16xf32>
    %69 = vector.shape_cast %68 : vector<32x16xf32> to vector<2x16x16xf32>
    %c1_48 = arith.constant 1 : index
    %c0_49 = arith.constant 0 : index
    %c0_50 = arith.constant 0 : index
    %70 = vector.load %arg8[%c1_48, %c0_49, %c0_50] : memref<2x32x16xbf16, #tpu.memory_space<vmem>>, vector<1x32x16xbf16>
    %71 = vector.shape_cast %70 : vector<1x32x16xbf16> to vector<32x16xbf16>
    %cst_51 = arith.constant dense<0.000000e+00> : vector<32x16xf32>
    %72 = tpu.matmul %3, %71, %cst_51 {dimension_numbers = #tpu.dot_dimension_numbers<[1], [0], [0], [1], [0, 0, 1, 1], [], []>} : vector<32x32xbf16>, vector<32x16xbf16>, vector<32x16xf32> -> vector<32x16xf32>
    %c1_52 = arith.constant 1 : index
    %c0_53 = arith.constant 0 : index
    %c0_54 = arith.constant 0 : index
    %73 = vector.load %arg9[%c1_52, %c0_53, %c0_54] : memref<2x1x16xf32, #tpu.memory_space<vmem>>, vector<1x1x16xf32>
    %74 = vector.shape_cast %73 : vector<1x1x16xf32> to vector<1x16xf32>
    %75 = vector.broadcast %74 : vector<1x16xf32> to vector<32x16xf32>
    %76 = arith.addf %72, %75 : vector<32x16xf32>
    %77 = vector.shape_cast %76 : vector<32x16xf32> to vector<2x16x16xf32>
    %78 = arith.truncf %77 : vector<2x16x16xf32> to vector<2x16x16xbf16>
    %79 = arith.truncf %61 : vector<2x8x16xf32> to vector<2x8x16xbf16>
    %80 = arith.truncf %69 : vector<2x16x16xf32> to vector<2x16x16xbf16>
    "tpu.trace_start"() <{level = 10 : i32, message = "bqd,bkd->bqk"}> : () -> ()
    %cst_55 = arith.constant dense<0.000000e+00> : vector<2x8x16xf32>
    %81 = tpu.matmul %79, %80, %cst_55 {dimension_numbers = #tpu.dot_dimension_numbers<[2], [2], [1], [1], [0, 0, 0, 1, 1, 1], [0], [0]>} : vector<2x8x16xbf16>, vector<2x16x16xbf16>, vector<2x8x16xf32> -> vector<2x8x16xf32>
    "tpu.trace_stop"() : () -> ()
    %82 = arith.addf %81, %9 : vector<2x8x16xf32>
    %cst_56 = arith.constant dense<0xFF800000> : vector<2x8xf32>
    %83 = vector.multi_reduction <maximumf>, %82, %cst_56 [2] : vector<2x8x16xf32> to vector<2x8xf32>
    %84 = vector.shape_cast %83 : vector<2x8xf32> to vector<2x8x1xf32>
    %85 = vector.broadcast %84 : vector<2x8x1xf32> to vector<2x8x16xf32>
    %86 = arith.subf %82, %85 : vector<2x8x16xf32>
    %87 = math.exp %86 : vector<2x8x16xf32>
    %cst_57 = arith.constant dense<0.000000e+00> : vector<2x8xf32>
    %88 = vector.multi_reduction <add>, %87, %cst_57 [2] : vector<2x8x16xf32> to vector<2x8xf32>
    %89 = vector.shape_cast %88 : vector<2x8xf32> to vector<2x8x1xf32>
    %90 = tpu.reciprocal %89 {approx = true} : vector<2x8x1xf32> -> vector<2x8x1xf32>
    %91 = arith.mulf %90, %11 : vector<2x8x1xf32>
    %92 = vector.broadcast %91 : vector<2x8x1xf32> to vector<2x8x16xf32>
    %93 = arith.mulf %87, %92 : vector<2x8x16xf32>
    %94 = arith.truncf %93 : vector<2x8x16xf32> to vector<2x8x16xbf16>
    "tpu.trace_start"() <{level = 10 : i32, message = "bqk,bkd->bqd"}> : () -> ()
    %cst_58 = arith.constant dense<0.000000e+00> : vector<2x8x16xf32>
    %95 = tpu.matmul %94, %78, %cst_58 {dimension_numbers = #tpu.dot_dimension_numbers<[2], [1], [1], [2], [0, 0, 0, 1, 1, 2], [0], [0]>} : vector<2x8x16xbf16>, vector<2x16x16xbf16>, vector<2x8x16xf32> -> vector<2x8x16xf32>
    "tpu.trace_stop"() : () -> ()
    %96 = tpu.concatenate %53, %95 in 2 : vector<2x8x16xf32>, vector<2x8x16xf32> -> vector<2x8x32xf32>
    %c0_59 = arith.constant 0 : index
    %c0_60 = arith.constant 0 : index
    %c0_61 = arith.constant 0 : index
    %97 = vector.load %arg10[%c0_59, %c0_60, %c0_61] : memref<2x8x32xf32, #tpu.memory_space<vmem>>, vector<2x8x32xf32>
    tpu.vector_store %arg10[%c0_59, %c0_60, %c0_61], %96 {strides = array<i32>} : memref<2x8x32xf32, #tpu.memory_space<vmem>>, vector<2x8x32xf32>,
    return
  }
  func.func @transform_0(%arg0: i32) -> (i32, i32, i32) {
    %c0_i32 = arith.constant 0 : i32
    %c0_i32_0 = arith.constant 0 : i32
    %c0_i32_1 = arith.constant 0 : i32
    return %arg0, %c0_i32, %c0_i32_0 : i32, i32, i32
  }
  func.func @transform_1(%arg0: i32) -> (i32, i32, i32) {
    %c0_i32 = arith.constant 0 : i32
    %c0_i32_0 = arith.constant 0 : i32
    %c0_i32_1 = arith.constant 0 : i32
    return %arg0, %c0_i32, %c0_i32_0 : i32, i32, i32
  }
  func.func @transform_2(%arg0: i32) -> (i32, i32, i32) {
    %c0_i32 = arith.constant 0 : i32
    %c0_i32_0 = arith.constant 0 : i32
    %c0_i32_1 = arith.constant 0 : i32
    return %arg0, %c0_i32, %c0_i32_0 : i32, i32, i32
  }
  func.func @transform_3(%arg0: i32) -> (i32, i32, i32) {
    %c0_i32 = arith.constant 0 : i32
    %c0_i32_0 = arith.constant 0 : i32
    %c0_i32_1 = arith.constant 0 : i32
    %c0_i32_2 = arith.constant 0 : i32
    return %c0_i32, %c0_i32_0, %c0_i32_1 : i32, i32, i32
  }
  func.func @transform_4(%arg0: i32) -> (i32, i32, i32) {
    %c0_i32 = arith.constant 0 : i32
    %c0_i32_0 = arith.constant 0 : i32
    %c0_i32_1 = arith.constant 0 : i32
    %c0_i32_2 = arith.constant 0 : i32
    return %c0_i32, %c0_i32_0, %c0_i32_1 : i32, i32, i32
  }
  func.func @transform_5(%arg0: i32) -> (i32, i32, i32) {
    %c0_i32 = arith.constant 0 : i32
    %c0_i32_0 = arith.constant 0 : i32
    %c0_i32_1 = arith.constant 0 : i32
    %c0_i32_2 = arith.constant 0 : i32
    return %c0_i32, %c0_i32_0, %c0_i32_1 : i32, i32, i32
  }
  func.func @transform_6(%arg0: i32) -> (i32, i32, i32) {
    %c0_i32 = arith.constant 0 : i32
    %c0_i32_0 = arith.constant 0 : i32
    %c0_i32_1 = arith.constant 0 : i32
    %c0_i32_2 = arith.constant 0 : i32
    return %c0_i32, %c0_i32_0, %c0_i32_1 : i32, i32, i32
  }
  func.func @transform_7(%arg0: i32) -> (i32, i32, i32) {
    %c0_i32 = arith.constant 0 : i32
    %c0_i32_0 = arith.constant 0 : i32
    %c0_i32_1 = arith.constant 0 : i32
    %c0_i32_2 = arith.constant 0 : i32
    return %c0_i32, %c0_i32_0, %c0_i32_1 : i32, i32, i32
  }
  func.func @transform_8(%arg0: i32) -> (i32, i32, i32) {
    %c0_i32 = arith.constant 0 : i32
    %c0_i32_0 = arith.constant 0 : i32
    %c0_i32_1 = arith.constant 0 : i32
    %c0_i32_2 = arith.constant 0 : i32
    return %c0_i32, %c0_i32_0, %c0_i32_1 : i32, i32, i32
  }
  func.func @transform_9(%arg0: i32) -> (i32, i32, i32) {
    %c0_i32 = arith.constant 0 : i32
    %c0_i32_0 = arith.constant 0 : i32
    %c0_i32_1 = arith.constant 0 : i32
    return %arg0, %c0_i32, %c0_i32_0 : i32, i32, i32
  }
}

</mosaic_0001>

<llo_original>
// kernel: tpu_custom_call.1
$region0: #{tpu_custom_call.1}
  #allocation0 [shape = 'u32[]', space=smem, size = 0x4, offset = 0x4, fixed_abs, tag = 'smem constant byte address 0x4 - core index']
  #allocation1 [shape = 'u32[144,128]{1,0:T(1,128)}', space=vmem, size = 0x12000, scoped, tag = 'internal scratch']
  %s0 = inlined_call_operand.vmem [shape: bf16[2,8,32], index: 0, kind: input, shape index: {}]
  %s1 = inlined_call_operand.vmem [shape: bf16[2,16,32], index: 1, kind: input, shape index: {}]
  %s2 = inlined_call_operand.vmem [shape: s8[2,8,16], index: 2, kind: input, shape index: {}]
  %s3 = inlined_call_operand.vmem [shape: bf16[2,32,16], index: 3, kind: input, shape index: {}]
  %s4 = inlined_call_operand.vmem [shape: f32[2,1,16], index: 4, kind: input, shape index: {}]
  %s5 = inlined_call_operand.vmem [shape: bf16[2,32,16], index: 5, kind: input, shape index: {}]
  %s6 = inlined_call_operand.vmem [shape: f32[2,1,16], index: 6, kind: input, shape index: {}]
  %s7 = inlined_call_operand.vmem [shape: bf16[2,32,16], index: 7, kind: input, shape index: {}]
  %s8 = inlined_call_operand.vmem [shape: f32[2,1,16], index: 8, kind: input, shape index: {}]
  %s9 = inlined_call_operand.hbm [shape: f32[2,8,32], index: 9, kind: output, shape index: {}]
  %s10 = sld [smem:[#allocation0]]
  $region46: #{tpu_custom_call.1} parent=0
    _
  %s12 = ssub.s32 1, %s10
  %s13 = scalar_select 0, %s12, %s10
  $region1: #{tpu_custom_call.1} parent=0
    #allocation2 [shape = 'u8[8192]{0}', space=vmem, size = 0x2000, scoped, tag = 'output window, operand 0, single buffered']
    #allocation3 [shape = 's32[1]{0}', space=sflag, size = 0x4, scoped, tag = 'scoped memory for tpu_custom_call.1']
    %14 = vsyncpa [#allocation3], 0
    // Predicated region
    $region2: #{tpu_custom_call.1} parent=1 // pred_check
      _
    $region3: #{tpu_custom_call.1} parent=1 // pred_check_branch
      %16 = sbr.rel (0) target = $region5
    $region4: #{tpu_custom_call.1} parent=1 // pred_region
      _
    $region5: #{tpu_custom_call.1} parent=1 // pred_fallthru
      _
    // Predicated region
    $region6: #{tpu_custom_call.1} parent=1 // pred_check
      _
    $region7: #{tpu_custom_call.1} parent=1 // pred_check_branch
      %18 = sbr.rel (0) target = $region9
    $region8: #{tpu_custom_call.1} parent=1 // pred_region
      _
    $region9: #{tpu_custom_call.1} parent=1 // pred_fallthru
      _
    // Predicated region
    $region10: #{tpu_custom_call.1} parent=1 // pred_check
      _
    $region11: #{tpu_custom_call.1} parent=1 // pred_check_branch
      %20 = sbr.rel (0) target = $region13
    $region12: #{tpu_custom_call.1} parent=1 // pred_region
      _
    $region13: #{tpu_custom_call.1} parent=1 // pred_fallthru
      _
    // Predicated region
    $region14: #{tpu_custom_call.1} parent=1 // pred_check
      _
    $region15: #{tpu_custom_call.1} parent=1 // pred_check_branch
      %22 = sbr.rel (0) target = $region17
    $region16: #{tpu_custom_call.1} parent=1 // pred_region
      _
    $region17: #{tpu_custom_call.1} parent=1 // pred_fallthru
      _
    // Predicated region
    $region18: #{tpu_custom_call.1} parent=1 // pred_check
      _
    $region19: #{tpu_custom_call.1} parent=1 // pred_check_branch
      %24 = sbr.rel (0) target = $region21
    $region20: #{tpu_custom_call.1} parent=1 // pred_region
      _
    $region21: #{tpu_custom_call.1} parent=1 // pred_fallthru
      _
    // Predicated region
    $region22: #{tpu_custom_call.1} parent=1 // pred_check
      _
    $region23: #{tpu_custom_call.1} parent=1 // pred_check_branch
      %26 = sbr.rel (0) target = $region25
    $region24: #{tpu_custom_call.1} parent=1 // pred_region
      _
    $region25: #{tpu_custom_call.1} parent=1 // pred_fallthru
      _
    // Predicated region
    $region26: #{tpu_custom_call.1} parent=1 // pred_check
      _
    $region27: #{tpu_custom_call.1} parent=1 // pred_check_branch
      %28 = sbr.rel (0) target = $region29
    $region28: #{tpu_custom_call.1} parent=1 // pred_region
      _
    $region29: #{tpu_custom_call.1} parent=1 // pred_fallthru
      _
    // Predicated region
    $region30: #{tpu_custom_call.1} parent=1 // pred_check
      _
    $region31: #{tpu_custom_call.1} parent=1 // pred_check_branch
      %30 = sbr.rel (0) target = $region33
    $region32: #{tpu_custom_call.1} parent=1 // pred_region
      _
    $region33: #{tpu_custom_call.1} parent=1 // pred_fallthru
      _
    // Predicated region
    $region34: #{tpu_custom_call.1} parent=1 // pred_check
      _
    $region35: #{tpu_custom_call.1} parent=1 // pred_check_branch
      %32 = sbr.rel (0) target = $region37
    $region36: #{tpu_custom_call.1} parent=1 // pred_region
      _
    $region37: #{tpu_custom_call.1} parent=1 // pred_fallthru
      _
    %v34 = vld [vmem:[%s0] sm:$0xf]
    %v35 = vld [vmem:[%s0 + $0x4] sm:$0xf]
    %v36 = vld [vmem:[%s1] sm:$0xf]
    %v37 = vld [vmem:[%s1 + $0x4] sm:$0xf]
    %v38 = vld [vmem:[%s1 + $0x8] sm:$0xf]
    %v39 = vld [vmem:[%s1 + $0xc] sm:$0xf]
    %v40 = vld [vmem:[%s2] sm:$0x3]
    %v41 = vld [vmem:[%s2 + $0x2] sm:$0x3]
    %v42 = vunpack.c.0.s8 %v40
    %v43 = vunpack.c.0.s8 %v41
    %v44 = vcvt.s32.f32 %v42
    %v45 = vcvt.s32.f32 %v43
    %v46 = vsub.f32 %v44, 1.0
    %v47 = vsub.f32 %v45, 1.0
    %v48 = vmul.f32 %v46, 4096.0
    %v49 = vmul.f32 %v47, 4096.0
    %vm50 = vcmask 130048
    %v51 = vsel %vm50, %v44, -inf
    %52 = vmax.xlane.f32.xlu0 %v51
    %v53 = vpop.xlane.xlu0 %52
    %v54 = vsel %vm50, %v45, -inf
    %55 = vmax.xlane.f32.xlu0 %v54
    %v56 = vpop.xlane.xlu0 %55
    %v57 = vld [vmem:[%s3] sm:$0xf]
    %v58 = vld [vmem:[%s3 + $0x4] sm:$0xf]
    %v59 = vld [vmem:[%s3 + $0x8] sm:$0xf]
    %v60 = vld [vmem:[%s3 + $0xc] sm:$0xf]
    %v61 = vld [vmem:[%s4] sm:$0x1]
    %v63 = vlaneseq
    %v64 = vshrl.u32 %v63, 7
    %v65 = vsub.s32 0, %v64
    %v66 = vrot.slane %v61, %v65
    %v70 = vunpack.c.l.b16 %v34
    %v71 = vunpack.c.l.b16 %v35
    %v72 = vpack.c.b16 %v71, %v70
    %v77 = vunpack.c.l.b16 %v57
    %v78 = vunpack.c.l.b16 %v58
    %v79 = vunpack.c.l.b16 %v59
    %v80 = vunpack.c.l.b16 %v60
    %v81 = vpack.c.b16 %v78, %v77
    %v82 = vpack.c.b16 %v80, %v79
    %vm85 = vcmask 261120
    %v87 = vsel %vm85, %v72, 0
    %89 = vmatprep.subr.bf16.mxu0 0
    %90 = vmatpush1.bf16.msra.mxu0 0
    %91 = vmatprep.subr.bf16.mxu0 0
    %92 = vmatpush1.bf16.msra.mxu0 0
    %93 = vmatprep.subr.bf16.mxu0 0
    %94 = vmatpush1.bf16.msra.mxu0 0
    %95 = vmatprep.subr.bf16.mxu0 0
    %96 = vmatpush1.bf16.msra.mxu0 0
    %97 = vmatprep.subr.bf16.mxu0 0
    %98 = vmatpush1.bf16.msra.mxu0 0
    %99 = vmatprep.subr.bf16.mxu0 0
    %100 = vmatpush1.bf16.msra.mxu0 0
    %101 = vmatprep.subr.bf16.mxu0 0
    %102 = vmatpush1.bf16.msra.mxu0 %v82
    %103 = vmatprep.subr.bf16.mxu0 0
    %104 = vmatpush1.bf16.msra.mxu0 %v81
    %105 = vmatprep.subr.bf16.mxu0 0
    %106 = vmatpush2.bf16.msra.mxu0 0
    %107 = vmatprep.subr.bf16.mxu0 0
    %108 = vmatpush2.bf16.msra.mxu0 0
    %109 = vmatprep.subr.bf16.mxu0 0
    %110 = vmatpush2.bf16.msra.mxu0 0
    %111 = vmatprep.subr.bf16.mxu0 0
    %112 = vmatpush2.bf16.msra.mxu0 0
    %113 = vmatprep.subr.bf16.mxu0 0
    %114 = vmatpush2.bf16.msra.mxu0 0
    %115 = vmatprep.subr.bf16.mxu0 0
    %116 = vmatpush2.bf16.msra.mxu0 0
    %117 = vmatprep.subr.bf16.mxu0 0
    %118 = vmatpush2.bf16.msra.mxu0 0
    %119 = vmatprep.subr.bf16.mxu0 0
    %120 = vmatpush2.bf16.msra.mxu0 0
    %121 = vmatprep.mubr.bf16.mxu0 0
    %122 = vmatmul.mubr.bf16.gmra.mxu0 %v87
    %v123 = vpop.f32.mrf.mxu0
    %v124 = vadd.f32 %v66, %v123
    %v125 = vpop.f32.mrf.mxu0
    %v126 = vpop.f32.mrf.mxu0
    %v127 = vadd.f32 %v66, %v126
    %v128 = vpop.f32.mrf.mxu0
    %129 = vdwg.mxu0
    %v130 = vld [vmem:[%s5] sm:$0xf]
    %v131 = vld [vmem:[%s5 + $0x4] sm:$0xf]
    %v132 = vld [vmem:[%s5 + $0x8] sm:$0xf]
    %v133 = vld [vmem:[%s5 + $0xc] sm:$0xf]
    %v134 = vld [vmem:[%s6] sm:$0x1]
    %v136 = vlaneseq
    %v137 = vshrl.u32 %v136, 7
    %v138 = vsub.s32 0, %v137
    %v139 = vrot.slane %v134, %v138
    %v145 = vunpack.c.l.b16 %v36
    %v146 = vunpack.c.l.b16 %v37
    %v147 = vunpack.c.l.b16 %v38
    %v148 = vunpack.c.l.b16 %v39
    %v149 = vpack.c.b16 %v146, %v145
    %v150 = vpack.c.b16 %v148, %v147
    %v155 = vunpack.c.l.b16 %v130
    %v156 = vunpack.c.l.b16 %v131
    %v157 = vunpack.c.l.b16 %v132
    %v158 = vunpack.c.l.b16 %v133
    %v159 = vpack.c.b16 %v156, %v155
    %v160 = vpack.c.b16 %v158, %v157
    %v164 = vsel %vm85, %v149, 0
    %v167 = vsel %vm85, %v150, 0
    %169 = vmatprep.subr.bf16.mxu0 0
    %170 = vmatpush1.bf16.msra.mxu0 0
    %171 = vmatprep.subr.bf16.mxu0 0
    %172 = vmatpush1.bf16.msra.mxu0 0
    %173 = vmatprep.subr.bf16.mxu0 0
    %174 = vmatpush1.bf16.msra.mxu0 0
    %175 = vmatprep.subr.bf16.mxu0 0
    %176 = vmatpush1.bf16.msra.mxu0 0
    %177 = vmatprep.subr.bf16.mxu0 0
    %178 = vmatpush1.bf16.msra.mxu0 0
    %179 = vmatprep.subr.bf16.mxu0 0
    %180 = vmatpush1.bf16.msra.mxu0 0
    %181 = vmatprep.subr.bf16.mxu0 0
    %182 = vmatpush1.bf16.msra.mxu0 %v160
    %183 = vmatprep.subr.bf16.mxu0 0
    %184 = vmatpush1.bf16.msra.mxu0 %v159
    %185 = vmatprep.subr.bf16.mxu0 0
    %186 = vmatpush2.bf16.msra.mxu0 0
    %187 = vmatprep.subr.bf16.mxu0 0
    %188 = vmatpush2.bf16.msra.mxu0 0
    %189 = vmatprep.subr.bf16.mxu0 0
    %190 = vmatpush2.bf16.msra.mxu0 0
    %191 = vmatprep.subr.bf16.mxu0 0
    %192 = vmatpush2.bf16.msra.mxu0 0
    %193 = vmatprep.subr.bf16.mxu0 0
    %194 = vmatpush2.bf16.msra.mxu0 0
    %195 = vmatprep.subr.bf16.mxu0 0
    %196 = vmatpush2.bf16.msra.mxu0 0
    %197 = vmatprep.subr.bf16.mxu0 0
    %198 = vmatpush2.bf16.msra.mxu0 0
    %199 = vmatprep.subr.bf16.mxu0 0
    %200 = vmatpush2.bf16.msra.mxu0 0
    %201 = vmatprep.mubr.bf16.mxu0 0
    %202 = vmatmul.mubr.bf16.gmra.mxu0 %v164
    %v203 = vpop.f32.mrf.mxu0
    %v204 = vadd.f32 %v139, %v203
    %v205 = vpop.f32.mrf.mxu0
    %v206 = vpop.f32.mrf.mxu0
    %v207 = vadd.f32 %v139, %v206
    %v208 = vpop.f32.mrf.mxu0
    %209 = vmatprep.mubr.bf16.mxu0 0
    %210 = vmatmul.mubr.bf16.gmra.mxu0 %v167
    %v211 = vpop.f32.mrf.mxu0
    %v212 = vadd.f32 %v139, %v211
    %v213 = vpop.f32.mrf.mxu0
    %v214 = vpop.f32.mrf.mxu0
    %v215 = vadd.f32 %v139, %v214
    %v216 = vpop.f32.mrf.mxu0
    %217 = vdwg.mxu0
    %v218 = vld [vmem:[%s7] sm:$0xf]
    %v219 = vld [vmem:[%s7 + $0x4] sm:$0xf]
    %v220 = vld [vmem:[%s7 + $0x8] sm:$0xf]
    %v221 = vld [vmem:[%s7 + $0xc] sm:$0xf]
    %v222 = vld [vmem:[%s8] sm:$0x1]
    %v224 = vlaneseq
    %v225 = vshrl.u32 %v224, 7
    %v226 = vsub.s32 0, %v225
    %v227 = vrot.slane %v222, %v226
    %v233 = vunpack.c.l.b16 %v218
    %v234 = vunpack.c.l.b16 %v219
    %v235 = vunpack.c.l.b16 %v220
    %v236 = vunpack.c.l.b16 %v221
    %v237 = vpack.c.b16 %v234, %v233
    %v238 = vpack.c.b16 %v236, %v235
    %241 = vmatprep.subr.bf16.mxu0 0
    %242 = vmatpush1.bf16.msra.mxu0 0
    %243 = vmatprep.subr.bf16.mxu0 0
    %244 = vmatpush1.bf16.msra.mxu0 0
    %245 = vmatprep.subr.bf16.mxu0 0
    %246 = vmatpush1.bf16.msra.mxu0 0
    %247 = vmatprep.subr.bf16.mxu0 0
    %248 = vmatpush1.bf16.msra.mxu0 0
    %249 = vmatprep.subr.bf16.mxu0 0
    %250 = vmatpush1.bf16.msra.mxu0 0
    %251 = vmatprep.subr.bf16.mxu0 0
    %252 = vmatpush1.bf16.msra.mxu0 0
    %253 = vmatprep.subr.bf16.mxu0 0
    %254 = vmatpush1.bf16.msra.mxu0 %v238
    %255 = vmatprep.subr.bf16.mxu0 0
    %256 = vmatpush1.bf16.msra.mxu0 %v237
    %257 = vmatprep.subr.bf16.mxu0 0
    %258 = vmatpush2.bf16.msra.mxu0 0
    %259 = vmatprep.subr.bf16.mxu0 0
    %260 = vmatpush2.bf16.msra.mxu0 0
    %261 = vmatprep.subr.bf16.mxu0 0
    %262 = vmatpush2.bf16.msra.mxu0 0
    %263 = vmatprep.subr.bf16.mxu0 0
    %264 = vmatpush2.bf16.msra.mxu0 0
    %265 = vmatprep.subr.bf16.mxu0 0
    %266 = vmatpush2.bf16.msra.mxu0 0
    %267 = vmatprep.subr.bf16.mxu0 0
    %268 = vmatpush2.bf16.msra.mxu0 0
    %269 = vmatprep.subr.bf16.mxu0 0
    %270 = vmatpush2.bf16.msra.mxu0 0
    %271 = vmatprep.subr.bf16.mxu0 0
    %272 = vmatpush2.bf16.msra.mxu0 0
    %273 = vmatprep.mubr.bf16.mxu0 0
    %274 = vmatmul.mubr.bf16.gmra.mxu0 %v164
    %v275 = vpop.f32.mrf.mxu0
    %v276 = vadd.f32 %v227, %v275
    %v277 = vpop.f32.mrf.mxu0
    %v278 = vpop.f32.mrf.mxu0
    %v279 = vadd.f32 %v227, %v278
    %v280 = vpop.f32.mrf.mxu0
    %281 = vmatprep.mubr.bf16.mxu0 0
    %282 = vmatmul.mubr.bf16.gmra.mxu0 %v167
    %v283 = vpop.f32.mrf.mxu0
    %v284 = vadd.f32 %v227, %v283
    %v285 = vpop.f32.mrf.mxu0
    %v286 = vpop.f32.mrf.mxu0
    %v287 = vadd.f32 %v227, %v286
    %v288 = vpop.f32.mrf.mxu0
    %289 = vdwg.mxu0
    %v290 = vpack.c.bf16 %v279, %v276
    %v291 = vpack.c.bf16 %v287, %v284
    %v292 = vpack.c.bf16 %v124, %v124
    %v293 = vpack.c.bf16 %v127, %v127
    %v294 = vpack.c.bf16 %v207, %v204
    %v295 = vpack.c.bf16 %v215, %v212
    %v297 = vsel %vm50, %v292, 0
    %v300 = vsel %vm50, %v294, 0
    %302 = vmatprep.subr.bf16.mxu0 0
    %303 = vmatpush1.bf16.xpose.msra.mxu0 0
    %304 = vmatprep.subr.bf16.mxu0 0
    %305 = vmatpush1.bf16.xpose.msra.mxu0 0
    %306 = vmatprep.subr.bf16.mxu0 0
    %307 = vmatpush1.bf16.xpose.msra.mxu0 0
    %308 = vmatprep.subr.bf16.mxu0 0
    %309 = vmatpush1.bf16.xpose.msra.mxu0 0
    %310 = vmatprep.subr.bf16.mxu0 0
    %311 = vmatpush1.bf16.xpose.msra.mxu0 0
    %312 = vmatprep.subr.bf16.mxu0 0
    %313 = vmatpush1.bf16.xpose.msra.mxu0 0
    %314 = vmatprep.subr.bf16.mxu0 0
    %315 = vmatpush1.bf16.xpose.msra.mxu0 0
    %316 = vmatprep.subr.bf16.mxu0 0
    %317 = vmatpush1.bf16.xpose.msra.mxu0 %v300
    %318 = vmatprep.subr.bf16.mxu0 0
    %319 = vmatpush2.bf16.xpose.msra.mxu0 0
    %320 = vmatprep.subr.bf16.mxu0 0
    %321 = vmatpush2.bf16.xpose.msra.mxu0 0
    %322 = vmatprep.subr.bf16.mxu0 0
    %323 = vmatpush2.bf16.xpose.msra.mxu0 0
    %324 = vmatprep.subr.bf16.mxu0 0
    %325 = vmatpush2.bf16.xpose.msra.mxu0 0
    %326 = vmatprep.subr.bf16.mxu0 0
    %327 = vmatpush2.bf16.xpose.msra.mxu0 0
    %328 = vmatprep.subr.bf16.mxu0 0
    %329 = vmatpush2.bf16.xpose.msra.mxu0 0
    %330 = vmatprep.subr.bf16.mxu0 0
    %331 = vmatpush2.bf16.xpose.msra.mxu0 0
    %332 = vmatprep.subr.bf16.mxu0 0
    %333 = vmatpush2.bf16.xpose.msra.mxu0 0
    %334 = vmatprep.mubr.bf16.mxu0 0
    %335 = vmatmul.mubr.bf16.gmra.mxu0 %v297
    %v336 = vpop.f32.mrf.mxu0
    %v337 = vadd.f32 %v48, %v336
    %v338 = vpop.f32.mrf.mxu0
    %v339 = vpop.f32.mrf.mxu0
    %v340 = vpop.f32.mrf.mxu0
    %341 = vdwg.mxu0
    %v343 = vsel %vm50, %v293, 0
    %v346 = vsel %vm50, %v295, 0
    %348 = vmatprep.subr.bf16.mxu0 0
    %349 = vmatpush1.bf16.xpose.msra.mxu0 0
    %350 = vmatprep.subr.bf16.mxu0 0
    %351 = vmatpush1.bf16.xpose.msra.mxu0 0
    %352 = vmatprep.subr.bf16.mxu0 0
    %353 = vmatpush1.bf16.xpose.msra.mxu0 0
    %354 = vmatprep.subr.bf16.mxu0 0
    %355 = vmatpush1.bf16.xpose.msra.mxu0 0
    %356 = vmatprep.subr.bf16.mxu0 0
    %357 = vmatpush1.bf16.xpose.msra.mxu0 0
    %358 = vmatprep.subr.bf16.mxu0 0
    %359 = vmatpush1.bf16.xpose.msra.mxu0 0
    %360 = vmatprep.subr.bf16.mxu0 0
    %361 = vmatpush1.bf16.xpose.msra.mxu0 0
    %362 = vmatprep.subr.bf16.mxu0 0
    %363 = vmatpush1.bf16.xpose.msra.mxu0 %v346
    %364 = vmatprep.subr.bf16.mxu0 0
    %365 = vmatpush2.bf16.xpose.msra.mxu0 0
    %366 = vmatprep.subr.bf16.mxu0 0
    %367 = vmatpush2.bf16.xpose.msra.mxu0 0
    %368 = vmatprep.subr.bf16.mxu0 0
    %369 = vmatpush2.bf16.xpose.msra.mxu0 0
    %370 = vmatprep.subr.bf16.mxu0 0
    %371 = vmatpush2.bf16.xpose.msra.mxu0 0
    %372 = vmatprep.subr.bf16.mxu0 0
    %373 = vmatpush2.bf16.xpose.msra.mxu0 0
    %374 = vmatprep.subr.bf16.mxu0 0
    %375 = vmatpush2.bf16.xpose.msra.mxu0 0
    %376 = vmatprep.subr.bf16.mxu0 0
    %377 = vmatpush2.bf16.xpose.msra.mxu0 0
    %378 = vmatprep.subr.bf16.mxu0 0
    %379 = vmatpush2.bf16.xpose.msra.mxu0 0
    %380 = vmatprep.mubr.bf16.mxu0 0
    %381 = vmatmul.mubr.bf16.gmra.mxu0 %v343
    %v382 = vpop.f32.mrf.mxu0
    %v383 = vadd.f32 %v49, %v382
    %v384 = vpop.f32.mrf.mxu0
    %v385 = vpop.f32.mrf.mxu0
    %v386 = vpop.f32.mrf.mxu0
    %387 = vdwg.mxu0
    %v388 = vsel %vm50, %v337, -inf
    %389 = vmax.xlane.f32.xlu0 %v388
    %v390 = vpop.xlane.xlu0 %389
    %v391 = vsel %vm50, %v383, -inf
    %392 = vmax.xlane.f32.xlu0 %v391
    %v393 = vpop.xlane.xlu0 %392
    %v394 = vsub.f32 %v337, %v390
    %v395 = vsub.f32 %v383, %v393
    %v396 = vmul.f32 %v394, 1.442695
    %v397 = vpow.pop %v396
    %v398 = vmul.f32 %v395, 1.442695
    %v399 = vpow.pop %v398
    %v400 = vsel %vm50, %v397, 0.0
    %401 = vadd.xlane.f32.xlu0 %v400
    %v402 = vpop.xlane.xlu0 %401
    %v403 = vsel %vm50, %v399, 0.0
    %404 = vadd.xlane.f32.xlu0 %v403
    %v405 = vpop.xlane.xlu0 %404
    %v406 = vrcp.pop %v402
    %v407 = vrcp.pop %v405
    %v408 = vmul.f32 %v406, %v53
    %v409 = vmul.f32 %v407, %v56
    %v410 = vmul.f32 %v397, %v408
    %v411 = vmul.f32 %v399, %v409
    %v412 = vpack.c.bf16 %v410, %v410
    %v413 = vpack.c.bf16 %v411, %v411
    %v415 = vsel %vm50, %v412, 0
    %417 = vmatprep.subr.bf16.mxu0 0
    %418 = vmatpush1.bf16.msra.mxu0 0
    %419 = vmatprep.subr.bf16.mxu0 0
    %420 = vmatpush1.bf16.msra.mxu0 0
    %421 = vmatprep.subr.bf16.mxu0 0
    %422 = vmatpush1.bf16.msra.mxu0 0
    %423 = vmatprep.subr.bf16.mxu0 0
    %424 = vmatpush1.bf16.msra.mxu0 0
    %425 = vmatprep.subr.bf16.mxu0 0
    %426 = vmatpush1.bf16.msra.mxu0 0
    %427 = vmatprep.subr.bf16.mxu0 0
    %428 = vmatpush1.bf16.msra.mxu0 0
    %429 = vmatprep.subr.bf16.mxu0 0
    %430 = vmatpush1.bf16.msra.mxu0 0
    %431 = vmatprep.subr.bf16.mxu0 0
    %432 = vmatpush1.bf16.msra.mxu0 %v290
    %433 = vmatprep.subr.bf16.mxu0 0
    %434 = vmatpush2.bf16.msra.mxu0 0
    %435 = vmatprep.subr.bf16.mxu0 0
    %436 = vmatpush2.bf16.msra.mxu0 0
    %437 = vmatprep.subr.bf16.mxu0 0
    %438 = vmatpush2.bf16.msra.mxu0 0
    %439 = vmatprep.subr.bf16.mxu0 0
    %440 = vmatpush2.bf16.msra.mxu0 0
    %441 = vmatprep.subr.bf16.mxu0 0
    %442 = vmatpush2.bf16.msra.mxu0 0
    %443 = vmatprep.subr.bf16.mxu0 0
    %444 = vmatpush2.bf16.msra.mxu0 0
    %445 = vmatprep.subr.bf16.mxu0 0
    %446 = vmatpush2.bf16.msra.mxu0 0
    %447 = vmatprep.subr.bf16.mxu0 0
    %448 = vmatpush2.bf16.msra.mxu0 0
    %449 = vmatprep.mubr.bf16.mxu0 0
    %450 = vmatmul.mubr.bf16.gmra.mxu0 %v415
    %v451 = vpop.f32.mrf.mxu0
    %v452 = vadd.f32 0.0, %v451
    %v453 = vpop.f32.mrf.mxu0
    %v454 = vpop.f32.mrf.mxu0
    %v455 = vpop.f32.mrf.mxu0
    %456 = vdwg.mxu0
    %v458 = vsel %vm50, %v413, 0
    %460 = vmatprep.subr.bf16.mxu0 0
    %461 = vmatpush1.bf16.msra.mxu0 0
    %462 = vmatprep.subr.bf16.mxu0 0
    %463 = vmatpush1.bf16.msra.mxu0 0
    %464 = vmatprep.subr.bf16.mxu0 0
    %465 = vmatpush1.bf16.msra.mxu0 0
    %466 = vmatprep.subr.bf16.mxu0 0
    %467 = vmatpush1.bf16.msra.mxu0 0
    %468 = vmatprep.subr.bf16.mxu0 0
    %469 = vmatpush1.bf16.msra.mxu0 0
    %470 = vmatprep.subr.bf16.mxu0 0
    %471 = vmatpush1.bf16.msra.mxu0 0
    %472 = vmatprep.subr.bf16.mxu0 0
    %473 = vmatpush1.bf16.msra.mxu0 0
    %474 = vmatprep.subr.bf16.mxu0 0
    %475 = vmatpush1.bf16.msra.mxu0 %v291
    %476 = vmatprep.subr.bf16.mxu0 0
    %477 = vmatpush2.bf16.msra.mxu0 0
    %478 = vmatprep.subr.bf16.mxu0 0
    %479 = vmatpush2.bf16.msra.mxu0 0
    %480 = vmatprep.subr.bf16.mxu0 0
    %481 = vmatpush2.bf16.msra.mxu0 0
    %482 = vmatprep.subr.bf16.mxu0 0
    %483 = vmatpush2.bf16.msra.mxu0 0
    %484 = vmatprep.subr.bf16.mxu0 0
    %485 = vmatpush2.bf16.msra.mxu0 0
    %486 = vmatprep.subr.bf16.mxu0 0
    %487 = vmatpush2.bf16.msra.mxu0 0
    %488 = vmatprep.subr.bf16.mxu0 0
    %489 = vmatpush2.bf16.msra.mxu0 0
    %490 = vmatprep.subr.bf16.mxu0 0
    %491 = vmatpush2.bf16.msra.mxu0 0
    %492 = vmatprep.mubr.bf16.mxu0 0
    %493 = vmatmul.mubr.bf16.gmra.mxu0 %v458
    %v494 = vpop.f32.mrf.mxu0
    %v495 = vadd.f32 0.0, %v494
    %v496 = vpop.f32.mrf.mxu0
    %v497 = vpop.f32.mrf.mxu0
    %v498 = vpop.f32.mrf.mxu0
    %499 = vdwg.mxu0
    %s500 = scalar_lea.vmem %s3, 16
    %v501 = vld [vmem:[%s500] sm:$0xf]
    %v502 = vld [vmem:[%s500 + $0x4] sm:$0xf]
    %v503 = vld [vmem:[%s500 + $0x8] sm:$0xf]
    %v504 = vld [vmem:[%s500 + $0xc] sm:$0xf]
    %s505 = scalar_lea.vmem %s4, 1
    %v506 = vld [vmem:[%s505] sm:$0x1]
    %v508 = vlaneseq
    %v509 = vshrl.u32 %v508, 7
    %v510 = vsub.s32 0, %v509
    %v511 = vrot.slane %v506, %v510
    %v517 = vunpack.c.l.b16 %v501
    %v518 = vunpack.c.l.b16 %v502
    %v519 = vunpack.c.l.b16 %v503
    %v520 = vunpack.c.l.b16 %v504
    %v521 = vpack.c.b16 %v518, %v517
    %v522 = vpack.c.b16 %v520, %v519
    %525 = vmatprep.subr.bf16.mxu0 0
    %526 = vmatpush1.bf16.msra.mxu0 0
    %527 = vmatprep.subr.bf16.mxu0 0
    %528 = vmatpush1.bf16.msra.mxu0 0
    %529 = vmatprep.subr.bf16.mxu0 0
    %530 = vmatpush1.bf16.msra.mxu0 0
    %531 = vmatprep.subr.bf16.mxu0 0
    %532 = vmatpush1.bf16.msra.mxu0 0
    %533 = vmatprep.subr.bf16.mxu0 0
    %534 = vmatpush1.bf16.msra.mxu0 0
    %535 = vmatprep.subr.bf16.mxu0 0
    %536 = vmatpush1.bf16.msra.mxu0 0
    %537 = vmatprep.subr.bf16.mxu0 0
    %538 = vmatpush1.bf16.msra.mxu0 %v522
    %539 = vmatprep.subr.bf16.mxu0 0
    %540 = vmatpush1.bf16.msra.mxu0 %v521
    %541 = vmatprep.subr.bf16.mxu0 0
    %542 = vmatpush2.bf16.msra.mxu0 0
    %543 = vmatprep.subr.bf16.mxu0 0
    %544 = vmatpush2.bf16.msra.mxu0 0
    %545 = vmatprep.subr.bf16.mxu0 0
    %546 = vmatpush2.bf16.msra.mxu0 0
    %547 = vmatprep.subr.bf16.mxu0 0
    %548 = vmatpush2.bf16.msra.mxu0 0
    %549 = vmatprep.subr.bf16.mxu0 0
    %550 = vmatpush2.bf16.msra.mxu0 0
    %551 = vmatprep.subr.bf16.mxu0 0
    %552 = vmatpush2.bf16.msra.mxu0 0
    %553 = vmatprep.subr.bf16.mxu0 0
    %554 = vmatpush2.bf16.msra.mxu0 0
    %555 = vmatprep.subr.bf16.mxu0 0
    %556 = vmatpush2.bf16.msra.mxu0 0
    %557 = vmatprep.mubr.bf16.mxu0 0
    %558 = vmatmul.mubr.bf16.gmra.mxu0 %v87
    %v559 = vpop.f32.mrf.mxu0
    %v560 = vadd.f32 %v511, %v559
    %v561 = vpop.f32.mrf.mxu0
    %v562 = vpop.f32.mrf.mxu0
    %v563 = vadd.f32 %v511, %v562
    %v564 = vpop.f32.mrf.mxu0
    %565 = vdwg.mxu0
    %s566 = scalar_lea.vmem %s5, 16
    %v567 = vld [vmem:[%s566] sm:$0xf]
    %v568 = vld [vmem:[%s566 + $0x4] sm:$0xf]
    %v569 = vld [vmem:[%s566 + $0x8] sm:$0xf]
    %v570 = vld [vmem:[%s566 + $0xc] sm:$0xf]
    %s571 = scalar_lea.vmem %s6, 1
    %v572 = vld [vmem:[%s571] sm:$0x1]
    %v574 = vlaneseq
    %v575 = vshrl.u32 %v574, 7
    %v576 = vsub.s32 0, %v575
    %v577 = vrot.slane %v572, %v576
    %v583 = vunpack.c.l.b16 %v567
    %v584 = vunpack.c.l.b16 %v568
    %v585 = vunpack.c.l.b16 %v569
    %v586 = vunpack.c.l.b16 %v570
    %v587 = vpack.c.b16 %v584, %v583
    %v588 = vpack.c.b16 %v586, %v585
    %591 = vmatprep.subr.bf16.mxu0 0
    %592 = vmatpush1.bf16.msra.mxu0 0
    %593 = vmatprep.subr.bf16.mxu0 0
    %594 = vmatpush1.bf16.msra.mxu0 0
    %595 = vmatprep.subr.bf16.mxu0 0
    %596 = vmatpush1.bf16.msra.mxu0 0
    %597 = vmatprep.subr.bf16.mxu0 0
    %598 = vmatpush1.bf16.msra.mxu0 0
    %599 = vmatprep.subr.bf16.mxu0 0
    %600 = vmatpush1.bf16.msra.mxu0 0
    %601 = vmatprep.subr.bf16.mxu0 0
    %602 = vmatpush1.bf16.msra.mxu0 0
    %603 = vmatprep.subr.bf16.mxu0 0
    %604 = vmatpush1.bf16.msra.mxu0 %v588
    %605 = vmatprep.subr.bf16.mxu0 0
    %606 = vmatpush1.bf16.msra.mxu0 %v587
    %607 = vmatprep.subr.bf16.mxu0 0
    %608 = vmatpush2.bf16.msra.mxu0 0
    %609 = vmatprep.subr.bf16.mxu0 0
    %610 = vmatpush2.bf16.msra.mxu0 0
    %611 = vmatprep.subr.bf16.mxu0 0
    %612 = vmatpush2.bf16.msra.mxu0 0
    %613 = vmatprep.subr.bf16.mxu0 0
    %614 = vmatpush2.bf16.msra.mxu0 0
    %615 = vmatprep.subr.bf16.mxu0 0
    %616 = vmatpush2.bf16.msra.mxu0 0
    %617 = vmatprep.subr.bf16.mxu0 0
    %618 = vmatpush2.bf16.msra.mxu0 0
    %619 = vmatprep.subr.bf16.mxu0 0
    %620 = vmatpush2.bf16.msra.mxu0 0
    %621 = vmatprep.subr.bf16.mxu0 0
    %622 = vmatpush2.bf16.msra.mxu0 0
    %623 = vmatprep.mubr.bf16.mxu0 0
    %624 = vmatmul.mubr.bf16.gmra.mxu0 %v164
    %v625 = vpop.f32.mrf.mxu0
    %v626 = vadd.f32 %v577, %v625
    %v627 = vpop.f32.mrf.mxu0
    %v628 = vpop.f32.mrf.mxu0
    %v629 = vadd.f32 %v577, %v628
    %v630 = vpop.f32.mrf.mxu0
    %631 = vmatprep.mubr.bf16.mxu0 0
    %632 = vmatmul.mubr.bf16.gmra.mxu0 %v167
    %v633 = vpop.f32.mrf.mxu0
    %v634 = vadd.f32 %v577, %v633
    %v635 = vpop.f32.mrf.mxu0
    %v636 = vpop.f32.mrf.mxu0
    %v637 = vadd.f32 %v577, %v636
    %v638 = vpop.f32.mrf.mxu0
    %639 = vdwg.mxu0
    %s640 = scalar_lea.vmem %s7, 16
    %v641 = vld [vmem:[%s640] sm:$0xf]
    %v642 = vld [vmem:[%s640 + $0x4] sm:$0xf]
    %v643 = vld [vmem:[%s640 + $0x8] sm:$0xf]
    %v644 = vld [vmem:[%s640 + $0xc] sm:$0xf]
    %s645 = scalar_lea.vmem %s8, 1
    %v646 = vld [vmem:[%s645] sm:$0x1]
    %v648 = vlaneseq
    %v649 = vshrl.u32 %v648, 7
    %v650 = vsub.s32 0, %v649
    %v651 = vrot.slane %v646, %v650
    %v657 = vunpack.c.l.b16 %v641
    %v658 = vunpack.c.l.b16 %v642
    %v659 = vunpack.c.l.b16 %v643
    %v660 = vunpack.c.l.b16 %v644
    %v661 = vpack.c.b16 %v658, %v657
    %v662 = vpack.c.b16 %v660, %v659
    %665 = vmatprep.subr.bf16.mxu0 0
    %666 = vmatpush1.bf16.msra.mxu0 0
    %667 = vmatprep.subr.bf16.mxu0 0
    %668 = vmatpush1.bf16.msra.mxu0 0
    %669 = vmatprep.subr.bf16.mxu0 0
    %670 = vmatpush1.bf16.msra.mxu0 0
    %671 = vmatprep.subr.bf16.mxu0 0
    %672 = vmatpush1.bf16.msra.mxu0 0
    %673 = vmatprep.subr.bf16.mxu0 0
    %674 = vmatpush1.bf16.msra.mxu0 0
    %675 = vmatprep.subr.bf16.mxu0 0
    %676 = vmatpush1.bf16.msra.mxu0 0
    %677 = vmatprep.subr.bf16.mxu0 0
    %678 = vmatpush1.bf16.msra.mxu0 %v662
    %679 = vmatprep.subr.bf16.mxu0 0
    %680 = vmatpush1.bf16.msra.mxu0 %v661
    %681 = vmatprep.subr.bf16.mxu0 0
    %682 = vmatpush2.bf16.msra.mxu0 0
    %683 = vmatprep.subr.bf16.mxu0 0
    %684 = vmatpush2.bf16.msra.mxu0 0
    %685 = vmatprep.subr.bf16.mxu0 0
    %686 = vmatpush2.bf16.msra.mxu0 0
    %687 = vmatprep.subr.bf16.mxu0 0
    %688 = vmatpush2.bf16.msra.mxu0 0
    %689 = vmatprep.subr.bf16.mxu0 0
    %690 = vmatpush2.bf16.msra.mxu0 0
    %691 = vmatprep.subr.bf16.mxu0 0
    %692 = vmatpush2.bf16.msra.mxu0 0
    %693 = vmatprep.subr.bf16.mxu0 0
    %694 = vmatpush2.bf16.msra.mxu0 0
    %695 = vmatprep.subr.bf16.mxu0 0
    %696 = vmatpush2.bf16.msra.mxu0 0
    %697 = vmatprep.mubr.bf16.mxu0 0
    %698 = vmatmul.mubr.bf16.gmra.mxu0 %v164
    %v699 = vpop.f32.mrf.mxu0
    %v700 = vadd.f32 %v651, %v699
    %v701 = vpop.f32.mrf.mxu0
    %v702 = vpop.f32.mrf.mxu0
    %v703 = vadd.f32 %v651, %v702
    %v704 = vpop.f32.mrf.mxu0
    %705 = vmatprep.mubr.bf16.mxu0 0
    %706 = vmatmul.mubr.bf16.gmra.mxu0 %v167
    %v707 = vpop.f32.mrf.mxu0
    %v708 = vadd.f32 %v651, %v707
    %v709 = vpop.f32.mrf.mxu0
    %v710 = vpop.f32.mrf.mxu0
    %v711 = vadd.f32 %v651, %v710
    %v712 = vpop.f32.mrf.mxu0
    %713 = vdwg.mxu0
    %v714 = vpack.c.bf16 %v703, %v700
    %v715 = vpack.c.bf16 %v711, %v708
    %v716 = vpack.c.bf16 %v560, %v560
    %v717 = vpack.c.bf16 %v563, %v563
    %v718 = vpack.c.bf16 %v629, %v626
    %v719 = vpack.c.bf16 %v637, %v634
    %v721 = vsel %vm50, %v716, 0
    %v724 = vsel %vm50, %v718, 0
    %726 = vmatprep.subr.bf16.mxu0 0
    %727 = vmatpush1.bf16.xpose.msra.mxu0 0
    %728 = vmatprep.subr.bf16.mxu0 0
    %729 = vmatpush1.bf16.xpose.msra.mxu0 0
    %730 = vmatprep.subr.bf16.mxu0 0
    %731 = vmatpush1.bf16.xpose.msra.mxu0 0
    %732 = vmatprep.subr.bf16.mxu0 0
    %733 = vmatpush1.bf16.xpose.msra.mxu0 0
    %734 = vmatprep.subr.bf16.mxu0 0
    %735 = vmatpush1.bf16.xpose.msra.mxu0 0
    %736 = vmatprep.subr.bf16.mxu0 0
    %737 = vmatpush1.bf16.xpose.msra.mxu0 0
    %738 = vmatprep.subr.bf16.mxu0 0
    %739 = vmatpush1.bf16.xpose.msra.mxu0 0
    %740 = vmatprep.subr.bf16.mxu0 0
    %741 = vmatpush1.bf16.xpose.msra.mxu0 %v724
    %742 = vmatprep.subr.bf16.mxu0 0
    %743 = vmatpush2.bf16.xpose.msra.mxu0 0
    %744 = vmatprep.subr.bf16.mxu0 0
    %745 = vmatpush2.bf16.xpose.msra.mxu0 0
    %746 = vmatprep.subr.bf16.mxu0 0
    %747 = vmatpush2.bf16.xpose.msra.mxu0 0
    %748 = vmatprep.subr.bf16.mxu0 0
    %749 = vmatpush2.bf16.xpose.msra.mxu0 0
    %750 = vmatprep.subr.bf16.mxu0 0
    %751 = vmatpush2.bf16.xpose.msra.mxu0 0
    %752 = vmatprep.subr.bf16.mxu0 0
    %753 = vmatpush2.bf16.xpose.msra.mxu0 0
    %754 = vmatprep.subr.bf16.mxu0 0
    %755 = vmatpush2.bf16.xpose.msra.mxu0 0
    %756 = vmatprep.subr.bf16.mxu0 0
    %757 = vmatpush2.bf16.xpose.msra.mxu0 0
    %758 = vmatprep.mubr.bf16.mxu0 0
    %759 = vmatmul.mubr.bf16.gmra.mxu0 %v721
    %v760 = vpop.f32.mrf.mxu0
    %v761 = vadd.f32 %v48, %v760
    %v762 = vpop.f32.mrf.mxu0
    %v763 = vpop.f32.mrf.mxu0
    %v764 = vpop.f32.mrf.mxu0
    %765 = vdwg.mxu0
    %v767 = vsel %vm50, %v717, 0
    %v770 = vsel %vm50, %v719, 0
    %772 = vmatprep.subr.bf16.mxu0 0
    %773 = vmatpush1.bf16.xpose.msra.mxu0 0
    %774 = vmatprep.subr.bf16.mxu0 0
    %775 = vmatpush1.bf16.xpose.msra.mxu0 0
    %776 = vmatprep.subr.bf16.mxu0 0
    %777 = vmatpush1.bf16.xpose.msra.mxu0 0
    %778 = vmatprep.subr.bf16.mxu0 0
    %779 = vmatpush1.bf16.xpose.msra.mxu0 0
    %780 = vmatprep.subr.bf16.mxu0 0
    %781 = vmatpush1.bf16.xpose.msra.mxu0 0
    %782 = vmatprep.subr.bf16.mxu0 0
    %783 = vmatpush1.bf16.xpose.msra.mxu0 0
    %784 = vmatprep.subr.bf16.mxu0 0
    %785 = vmatpush1.bf16.xpose.msra.mxu0 0
    %786 = vmatprep.subr.bf16.mxu0 0
    %787 = vmatpush1.bf16.xpose.msra.mxu0 %v770
    %788 = vmatprep.subr.bf16.mxu0 0
    %789 = vmatpush2.bf16.xpose.msra.mxu0 0
    %790 = vmatprep.subr.bf16.mxu0 0
    %791 = vmatpush2.bf16.xpose.msra.mxu0 0
    %792 = vmatprep.subr.bf16.mxu0 0
    %793 = vmatpush2.bf16.xpose.msra.mxu0 0
    %794 = vmatprep.subr.bf16.mxu0 0
    %795 = vmatpush2.bf16.xpose.msra.mxu0 0
    %796 = vmatprep.subr.bf16.mxu0 0
    %797 = vmatpush2.bf16.xpose.msra.mxu0 0
    %798 = vmatprep.subr.bf16.mxu0 0
    %799 = vmatpush2.bf16.xpose.msra.mxu0 0
    %800 = vmatprep.subr.bf16.mxu0 0
    %801 = vmatpush2.bf16.xpose.msra.mxu0 0
    %802 = vmatprep.subr.bf16.mxu0 0
    %803 = vmatpush2.bf16.xpose.msra.mxu0 0
    %804 = vmatprep.mubr.bf16.mxu0 0
    %805 = vmatmul.mubr.bf16.gmra.mxu0 %v767
    %v806 = vpop.f32.mrf.mxu0
    %v807 = vadd.f32 %v49, %v806
    %v808 = vpop.f32.mrf.mxu0
    %v809 = vpop.f32.mrf.mxu0
    %v810 = vpop.f32.mrf.mxu0
    %811 = vdwg.mxu0
    %v812 = vsel %vm50, %v761, -inf
    %813 = vmax.xlane.f32.xlu0 %v812
    %v814 = vpop.xlane.xlu0 %813
    %v815 = vsel %vm50, %v807, -inf
    %816 = vmax.xlane.f32.xlu0 %v815
    %v817 = vpop.xlane.xlu0 %816
    %v818 = vsub.f32 %v761, %v814
    %v819 = vsub.f32 %v807, %v817
    %v820 = vmul.f32 %v818, 1.442695
    %v821 = vpow.pop %v820
    %v822 = vmul.f32 %v819, 1.442695
    %v823 = vpow.pop %v822
    %v824 = vsel %vm50, %v821, 0.0
    %825 = vadd.xlane.f32.xlu0 %v824
    %v826 = vpop.xlane.xlu0 %825
    %v827 = vsel %vm50, %v823, 0.0
    %828 = vadd.xlane.f32.xlu0 %v827
    %v829 = vpop.xlane.xlu0 %828
    %v830 = vrcp.pop %v826
    %v831 = vrcp.pop %v829
    %v832 = vmul.f32 %v830, %v53
    %v833 = vmul.f32 %v831, %v56
    %v834 = vmul.f32 %v821, %v832
    %v835 = vmul.f32 %v823, %v833
    %v836 = vpack.c.bf16 %v834, %v834
    %v837 = vpack.c.bf16 %v835, %v835
    %v839 = vsel %vm50, %v836, 0
    %841 = vmatprep.subr.bf16.mxu0 0
    %842 = vmatpush1.bf16.msra.mxu0 0
    %843 = vmatprep.subr.bf16.mxu0 0
    %844 = vmatpush1.bf16.msra.mxu0 0
    %845 = vmatprep.subr.bf16.mxu0 0
    %846 = vmatpush1.bf16.msra.mxu0 0
    %847 = vmatprep.subr.bf16.mxu0 0
    %848 = vmatpush1.bf16.msra.mxu0 0
    %849 = vmatprep.subr.bf16.mxu0 0
    %850 = vmatpush1.bf16.msra.mxu0 0
    %851 = vmatprep.subr.bf16.mxu0 0
    %852 = vmatpush1.bf16.msra.mxu0 0
    %853 = vmatprep.subr.bf16.mxu0 0
    %854 = vmatpush1.bf16.msra.mxu0 0
    %855 = vmatprep.subr.bf16.mxu0 0
    %856 = vmatpush1.bf16.msra.mxu0 %v714
    %857 = vmatprep.subr.bf16.mxu0 0
    %858 = vmatpush2.bf16.msra.mxu0 0
    %859 = vmatprep.subr.bf16.mxu0 0
    %860 = vmatpush2.bf16.msra.mxu0 0
    %861 = vmatprep.subr.bf16.mxu0 0
    %862 = vmatpush2.bf16.msra.mxu0 0
    %863 = vmatprep.subr.bf16.mxu0 0
    %864 = vmatpush2.bf16.msra.mxu0 0
    %865 = vmatprep.subr.bf16.mxu0 0
    %866 = vmatpush2.bf16.msra.mxu0 0
    %867 = vmatprep.subr.bf16.mxu0 0
    %868 = vmatpush2.bf16.msra.mxu0 0
    %869 = vmatprep.subr.bf16.mxu0 0
    %870 = vmatpush2.bf16.msra.mxu0 0
    %871 = vmatprep.subr.bf16.mxu0 0
    %872 = vmatpush2.bf16.msra.mxu0 0
    %873 = vmatprep.mubr.bf16.mxu0 0
    %874 = vmatmul.mubr.bf16.gmra.mxu0 %v839
    %v875 = vpop.f32.mrf.mxu0
    %v876 = vadd.f32 0.0, %v875
    %v877 = vpop.f32.mrf.mxu0
    %v878 = vpop.f32.mrf.mxu0
    %v879 = vpop.f32.mrf.mxu0
    %880 = vdwg.mxu0
    %v882 = vsel %vm50, %v837, 0
    %884 = vmatprep.subr.bf16.mxu0 0
    %885 = vmatpush1.bf16.msra.mxu0 0
    %886 = vmatprep.subr.bf16.mxu0 0
    %887 = vmatpush1.bf16.msra.mxu0 0
    %888 = vmatprep.subr.bf16.mxu0 0
    %889 = vmatpush1.bf16.msra.mxu0 0
    %890 = vmatprep.subr.bf16.mxu0 0
    %891 = vmatpush1.bf16.msra.mxu0 0
    %892 = vmatprep.subr.bf16.mxu0 0
    %893 = vmatpush1.bf16.msra.mxu0 0
    %894 = vmatprep.subr.bf16.mxu0 0
    %895 = vmatpush1.bf16.msra.mxu0 0
    %896 = vmatprep.subr.bf16.mxu0 0
    %897 = vmatpush1.bf16.msra.mxu0 0
    %898 = vmatprep.subr.bf16.mxu0 0
    %899 = vmatpush1.bf16.msra.mxu0 %v715
    %900 = vmatprep.subr.bf16.mxu0 0
    %901 = vmatpush2.bf16.msra.mxu0 0
    %902 = vmatprep.subr.bf16.mxu0 0
    %903 = vmatpush2.bf16.msra.mxu0 0
    %904 = vmatprep.subr.bf16.mxu0 0
    %905 = vmatpush2.bf16.msra.mxu0 0
    %906 = vmatprep.subr.bf16.mxu0 0
    %907 = vmatpush2.bf16.msra.mxu0 0
    %908 = vmatprep.subr.bf16.mxu0 0
    %909 = vmatpush2.bf16.msra.mxu0 0
    %910 = vmatprep.subr.bf16.mxu0 0
    %911 = vmatpush2.bf16.msra.mxu0 0
    %912 = vmatprep.subr.bf16.mxu0 0
    %913 = vmatpush2.bf16.msra.mxu0 0
    %914 = vmatprep.subr.bf16.mxu0 0
    %915 = vmatpush2.bf16.msra.mxu0 0
    %916 = vmatprep.mubr.bf16.mxu0 0
    %917 = vmatmul.mubr.bf16.gmra.mxu0 %v882
    %v918 = vpop.f32.mrf.mxu0
    %v919 = vadd.f32 0.0, %v918
    %v920 = vpop.f32.mrf.mxu0
    %v921 = vpop.f32.mrf.mxu0
    %v922 = vpop.f32.mrf.mxu0
    %923 = vdwg.mxu0
    %926 = vrot.lane.b32.xlu0 %v876, 16
    %v927 = vpop.permute.xlu0 %926
    %928 = vrot.lane.b32.xlu0 %v919, 16
    %v929 = vpop.permute.xlu0 %928
    %v932 = vsel %vm50, %v452, %v927
    %v933 = vsel %vm50, %v495, %v929
    %934 = vst.msk [vmem:[#allocation2] sm:$0xff] %vm85, %v932
    %935 = vst.msk [vmem:[#allocation2 + $0x8] sm:$0xff] %vm85, %v933
    // Predicated region
    $region38: #{tpu_custom_call.1} parent=1 // pred_check
      _
    $region39: #{tpu_custom_call.1} parent=1 // pred_check_branch
      %937 = sbr.rel (0) target = $region41
    $region40: #{tpu_custom_call.1} parent=1 // pred_region
      %s939 = ssub.s32 256, 256
      %940 = vsyncadd [#allocation3], %s939
      %s941 = sshll.u32 [#allocation2], 4
      %s942 = int_to_ptr.vmem [resolvable:$true] %s941
      %947 = dma.vmem_to_hbm [thread:$0]  %s942, 256, %s9, [#allocation3], 128, 128, 8
    $region41: #{tpu_custom_call.1} parent=1 // pred_fallthru
      _
    // Predicated region
    $region42: #{tpu_custom_call.1} parent=1 // pred_check
      _
    $region43: #{tpu_custom_call.1} parent=1 // pred_check_branch
      %949 = sbr.rel (0) target = $region45
    $region44: #{tpu_custom_call.1} parent=1 // pred_region
      %950 = dma.done [#allocation3], 256
    $region45: #{tpu_custom_call.1} parent=1 // pred_fallthru
      _
    %951 = vsyncpa [#allocation3], 1

</llo_original>
